<compile_context>
chip_gen: v5e
topology: v5e:2x2
jax: 0.10.0
libtpu: 0.0.40
codegen_flags: <defaults>
</compile_context>

<pallas_src>
import functools
import math

import jax
import jax.numpy as jnp
import numpy as np
from jax import lax
from jax.experimental import pallas as pl
from jax.experimental.pallas import tpu as pltpu


_BN_EPS = 1e-5
_NORM_EPS_SQ = 1e-24      # == (F.normalize eps 1e-12) ** 2
_NEG_BIG = -1e9           # BN "shift" for padded cluster lanes -> exp() underflows to 0


def _round_up(v, m):
    return ((v + m - 1) // m) * m


def _pick_row_tile(m):
    """Pass-1 row tile: as large as reasonable (per-step VMEM stays ~1-2 MiB)."""
    return 1024 if m >= 1024 else _round_up(m, 8)


def _pick_n_tile(n):
    """Pass-2 N tile: multiple of 128 (lane-dense assign stores) or the full N."""
    for t in (512, 256, 128):
        if n % t == 0:
            return t
    # TODO(synk): ragged N (no multiple-of-128 divisor) falls back to a single N tile.
    return n


def _vmem_limit_bytes():
    cap = 128 * 1024 * 1024
    try:
        cap = int(getattr(pltpu.get_tpu_info(), "vmem_capacity_bytes", cap))
    except Exception:
        pass
    # ~3/4 of physical, capped: ~96 MiB on v5e/v6e (128 MiB), ~48 MiB on v7x (64 MiB).
    return max(32 * 1024 * 1024, min(100 * 1024 * 1024, (cap * 3) // 4))


def _resident_spec(shape):
    """BlockSpec for a grid-invariant operand; single pipeline buffer if supported."""
    index_map = lambda *_: (0,) * len(shape)
    try:
        return pl.BlockSpec(shape, index_map, pipeline_mode=pl.Buffered(1))
    except Exception:  # older BlockSpec without pipeline_mode -> default double buffer
        return pl.BlockSpec(shape, index_map)


# ---------------------------------------------------------------------------
# Pass 1: per-row-tile BatchNorm partial sums (no logits written back to HBM).
# ---------------------------------------------------------------------------
def _bn_stats_kernel(x_ref, c_ref, psum_ref, pssq_ref):
    # (TM, D) bf16 @ (D, K_pad) bf16 -> (TM, K_pad) f32 on the MXU.
    logits = jnp.dot(x_ref[...], c_ref[...], preferred_element_type=jnp.float32)
    psum_ref[0] = jnp.sum(logits, axis=0, keepdims=True)
    pssq_ref[0] = jnp.sum(logits * logits, axis=0, keepdims=True)


# ---------------------------------------------------------------------------
# Pass 2: per-(batch, N-tile) BN + softmax + VLAD accumulation; normalize on last tile.
# ---------------------------------------------------------------------------
def _vlad_kernel(x_ref, c_ref, scale_ref, shift_ref, c2_ref,
                 vlad_ref, assign_ref, vlad_acc, asum_acc, *, K):
    n = pl.program_id(1)

    @pl.when(n == 0)
    def _():
        vlad_acc[...] = jnp.zeros_like(vlad_acc)
        asum_acc[...] = jnp.zeros_like(asum_acc)

    x_t = x_ref[0]                                               # (TN, D)     bf16
    # Recompute the logits for this tile (cheaper than round-tripping them via HBM).
    logits = jnp.dot(x_t, c_ref[...],
                     preferred_element_type=jnp.float32)         # (TN, K_pad) f32

    # BatchNorm via precomputed scale/shift (padded lanes: scale=0, shift=-1e9).
    y = logits * scale_ref[...] + shift_ref[...]

    # Softmax over clusters (lane axis).  Exact divide: `assign` is a returned output.
    m = jnp.max(y, axis=1, keepdims=True)
    e = jnp.exp(y - m)
    assign = e / jnp.sum(e, axis=1, keepdims=True)               # (TN, K_pad) f32

    # Returned assignment tile in (K, TN) layout.  The VLAD matmul below no longer
    # needs any transpose; this one only feeds the output store.
    assign_ref[0] = jnp.transpose(assign)[:K, :]

    asum_acc[...] += jnp.sum(assign, axis=0, keepdims=True)      # (1, K_pad)

    # VLAD partial: contract N of both operands -> (D, K_pad): D on sublanes, clusters
    # on lanes, i.e. already torch's (D, K) order.  bf16 operands, f32 accumulation.
    vlad_acc[...] += lax.dot_general(
        x_t, assign.astype(jnp.bfloat16),
        dimension_numbers=(((0,), (0,)), ((), ())),
        preferred_element_type=jnp.float32)

    @pl.when(n == pl.num_programs(1) - 1)
    def _():
        vlad = vlad_acc[...] - asum_acc[...] * c2_ref[...]       # padded lanes stay 0
        # Intra-normalize over D (F.normalize dim=1 on the (B, D, K) tensor).
        ss1 = jnp.sum(vlad * vlad, axis=0, keepdims=True)        # (1, K_pad)
        vlad = vlad * lax.rsqrt(jnp.maximum(ss1, _NORM_EPS_SQ))
        # Global L2 over the flattened D*K vector (padded lanes contribute exactly 0).
        ss2 = jnp.sum(jnp.sum(vlad * vlad, axis=0, keepdims=True),
                      axis=1, keepdims=True)                     # (1, 1)
        vlad = vlad * lax.rsqrt(jnp.maximum(ss2, _NORM_EPS_SQ))
        vlad_ref[0] = vlad                                       # (D, K_pad) lane-dense


def netvlad2_forward(x, clusters, clusters2, gamma, beta):
    B, N, D = x.shape
    K = clusters.shape[1]
    K_pad = _round_up(K, 128)            # clusters live on the 128-wide lane axis
    f32, bf16 = jnp.float32, jnp.bfloat16

    # --- parameters: pad the K axis; MXU operands in bf16, VPU operands stay f32 ---
    clusters_p = jnp.zeros((D, K_pad), f32).at[:, :K].set(clusters).astype(bf16)
    c2_p = jnp.zeros((D, K_pad), f32).at[:, :K].set(clusters2[0])   # un-transposed
    gamma_p = jnp.zeros((K_pad,), f32).at[:K].set(gamma.reshape(-1))
    beta_p = jnp.full((K_pad,), _NEG_BIG, f32).at[:K].set(beta.reshape(-1))

    x_bf = x.astype(bf16)
    vmem_limit = _vmem_limit_bytes()

    # ---------------- pass 1: BN partial sums over all B*N rows ----------------
    M = B * N
    TM = _pick_row_tile(M)
    M_pad = _round_up(M, TM)
    x_flat = x_bf.reshape(M, D)
    if M_pad != M:
        # Zero rows give logits == 0 exactly -> contribute 0 to both partials; the
        # true M is used below when turning the partials into mean / variance.
        x_flat = jnp.pad(x_flat, ((0, M_pad - M), (0, 0)))
    G = M_pad // TM

    psum, pssq = pl.pallas_call(
        _bn_stats_kernel,
        grid=(G,),
        in_specs=[
            pl.BlockSpec((TM, D), lambda i: (i, 0)),
            _resident_spec((D, K_pad)),
        ],
        out_specs=(
            pl.BlockSpec((1, 1, K_pad), lambda i: (i, 0, 0)),
            pl.BlockSpec((1, 1, K_pad), lambda i: (i, 0, 0)),
        ),
        out_shape=(
            jax.ShapeDtypeStruct((G, 1, K_pad), f32),
            jax.ShapeDtypeStruct((G, 1, K_pad), f32),
        ),
        compiler_params=pltpu.CompilerParams(
            dimension_semantics=("parallel",),
            vmem_limit_bytes=vmem_limit,
        ),
    )(x_flat, clusters_p)

    # --- tiny K_pad-sized BN statistics reduction in XLA (training mode, biased var) ---
    mean = jnp.sum(psum, axis=(0, 1)) / M
    var = jnp.maximum(jnp.sum(pssq, axis=(0, 1)) / M - mean * mean, 0.0)
    scale = gamma_p * lax.rsqrt(var + _BN_EPS)         # padded lanes: gamma=0 -> 0
    shift = beta_p - mean * scale                      # padded lanes: -1e9
    scale2d = scale.reshape(1, K_pad)
    shift2d = shift.reshape(1, K_pad)

    # --------- pass 2: B "parallel" x N-tiles "arbitrary", VMEM accumulators ---------
    TN = _pick_n_tile(N)
    NT = N // TN

    vlad_dk, assign_t = pl.pallas_call(
        functools.partial(_vlad_kernel, K=K),
        grid=(B, NT),
        in_specs=[
            pl.BlockSpec((1, TN, D), lambda b, n: (b, n, 0)),
            _resident_spec((D, K_pad)),
            _resident_spec((1, K_pad)),
            _resident_spec((1, K_pad)),
            _resident_spec((D, K_pad)),
        ],
        out_specs=(
            pl.BlockSpec((1, D, K_pad), lambda b, n: (b, 0, 0)),
            pl.BlockSpec((1, K, TN), lambda b, n: (b, 0, n)),
        ),
        out_shape=(
            jax.ShapeDtypeStruct((B, D, K_pad), f32),
            jax.ShapeDtypeStruct((B, K, N), f32),
        ),
        scratch_shapes=[
            pltpu.VMEM((D, K_pad), f32),   # vlad accumulator (torch (D, K) order)
            pltpu.VMEM((1, K_pad), f32),   # a_sum accumulator
        ],
        compiler_params=pltpu.CompilerParams(
            dimension_semantics=("parallel", "arbitrary"),
            vmem_limit_bytes=vmem_limit,
        ),
    )(x_bf, clusters_p, scale2d, shift2d, c2_p)

    # Already in torch's (B, D, K) order: drop the padded lanes, flatten to (B, D*K).
    vlad = vlad_dk[:, :, :K].reshape(B, D * K)
    return vlad, assign_t


def netvlad2_ref(x, clusters, clusters2, gamma, beta):
    """Pure-JAX f32 reference matching the PyTorch forward exactly."""
    B, N, D = x.shape
    K = clusters.shape[1]
    xf = x.reshape(-1, D)
    assignment = xf @ clusters
    mean = assignment.mean(axis=0)
    var = assignment.var(axis=0)                      # biased (ddof=0), like PyTorch BN
    assignment = (assignment - mean) / jnp.sqrt(var + _BN_EPS)
    assignment = assignment * gamma.reshape(-1) + beta.reshape(-1)
    assignment = jax.nn.softmax(assignment, axis=1)
    assignment = assignment.reshape(B, N, K)
    a_sum = assignment.sum(axis=1, keepdims=True)
    a = a_sum * clusters2
    assignment_t = jnp.transpose(assignment, (0, 2, 1))
    xr = xf.reshape(B, N, D)
    vlad = jnp.matmul(assignment_t, xr)               # (B, K, D)
    vlad = jnp.transpose(vlad, (0, 2, 1))             # (B, D, K)
    vlad = vlad - a
    n1 = jnp.sqrt(jnp.sum(vlad * vlad, axis=1, keepdims=True))
    vlad = vlad / jnp.maximum(n1, 1e-12)
    vlad = vlad.reshape(B, K * D)
    n2 = jnp.sqrt(jnp.sum(vlad * vlad, axis=1, keepdims=True))
    vlad = vlad / jnp.maximum(n2, 1e-12)
    return vlad, assignment_t


if __name__ == "__main__":
    B, N, D, K = 2, 8, 32, 16        # batch, num_features, feature_size, cluster_size

    key = jax.random.PRNGKey(0)
    k_x, k_c, k_c2 = jax.random.split(key, 3)

    init_sc = 1.0 / math.sqrt(D)
    x = jax.random.normal(k_x, (B, N, D), dtype=jnp.float32)
    clusters = init_sc * jax.random.normal(k_c, (D, K), dtype=jnp.float32)
    clusters2 = init_sc * jax.random.normal(k_c2, (1, D, K), dtype=jnp.float32)
    gamma = jnp.ones((1, K), dtype=jnp.float32)       # BatchNorm1d weight init
    beta = jnp.zeros((1, K), dtype=jnp.float32)       # BatchNorm1d bias init

    vlad, assign_t = netvlad2_forward(x, clusters, clusters2, gamma, beta)
    jax.block_until_ready((vlad, assign_t))

    vlad_ref, assign_ref = netvlad2_ref(x, clusters, clusters2, gamma, beta)
    # bf16 MXU operands (per perf guidance) -> loosened tolerances vs the f32 reference.
    np.testing.assert_allclose(np.asarray(vlad), np.asarray(vlad_ref),
                               rtol=2e-2, atol=2e-2)
    np.testing.assert_allclose(np.asarray(assign_t), np.asarray(assign_ref),
                               rtol=2e-2, atol=2e-2)

    print("KERNEL_OK")
</pallas_src>

<mosaic_0001>
module attributes {stable_mosaic.version = 11 : i64} {
  func.func @_bn_stats_kernel(%arg0: i32, %arg1: memref<16x32xbf16, #tpu.memory_space<vmem>>, %arg2: memref<32x128xbf16, #tpu.memory_space<vmem>>, %arg3: memref<1x1x128xf32, #tpu.memory_space<vmem>>, %arg4: memref<1x1x128xf32, #tpu.memory_space<vmem>>) attributes {dimension_semantics = [#tpu.dimension_semantics<parallel>], iteration_bounds = array<i64: 1>, scalar_prefetch = 0 : i64, scratch_operands = 0 : i64, tpu.core_type = #tpu.core_type<tc>, window_params = [{transform_indices = @transform_0, window_bounds = array<i64: 16, 32>}, {pipeline_mode = #tpu.pipeline_mode<synchronous>, transform_indices = @transform_1, window_bounds = array<i64: 32, 128>}, {transform_indices = @transform_2, window_bounds = array<i64: 1, 1, 128>}, {transform_indices = @transform_3, window_bounds = array<i64: 1, 1, 128>}]} {
    %c0 = arith.constant 0 : index
    %c0_0 = arith.constant 0 : index
    %0 = vector.load %arg1[%c0, %c0_0] : memref<16x32xbf16, #tpu.memory_space<vmem>>, vector<16x32xbf16>
    %c0_1 = arith.constant 0 : index
    %c0_2 = arith.constant 0 : index
    %1 = vector.load %arg2[%c0_1, %c0_2] : memref<32x128xbf16, #tpu.memory_space<vmem>>, vector<32x128xbf16>
    %cst = arith.constant dense<0.000000e+00> : vector<16x128xf32>
    %2 = tpu.matmul %0, %1, %cst {dimension_numbers = #tpu.dot_dimension_numbers<[1], [0], [0], [1], [0, 0, 1, 1], [], []>} : vector<16x32xbf16>, vector<32x128xbf16>, vector<16x128xf32> -> vector<16x128xf32>
    %cst_3 = arith.constant dense<0.000000e+00> : vector<128xf32>
    %3 = vector.multi_reduction <add>, %2, %cst_3 [0] : vector<16x128xf32> to vector<128xf32>
    %4 = vector.shape_cast %3 : vector<128xf32> to vector<1x128xf32>
    %c0_4 = arith.constant 0 : index
    %c0_5 = arith.constant 0 : index
    %c0_6 = arith.constant 0 : index
    %5 = vector.load %arg3[%c0_4, %c0_5, %c0_6] : memref<1x1x128xf32, #tpu.memory_space<vmem>>, vector<1x1x128xf32>
    %6 = vector.shape_cast %5 : vector<1x1x128xf32> to vector<1x128xf32>
    %7 = vector.shape_cast %4 : vector<1x128xf32> to vector<1x1x128xf32>
    tpu.vector_store %arg3[%c0_4, %c0_5, %c0_6], %7 {strides = array<i32>} : memref<1x1x128xf32, #tpu.memory_space<vmem>>, vector<1x1x128xf32>,
    %8 = arith.mulf %2, %2 : vector<16x128xf32>
    %cst_7 = arith.constant dense<0.000000e+00> : vector<128xf32>
    %9 = vector.multi_reduction <add>, %8, %cst_7 [0] : vector<16x128xf32> to vector<128xf32>
    %10 = vector.shape_cast %9 : vector<128xf32> to vector<1x128xf32>
    %c0_8 = arith.constant 0 : index
    %c0_9 = arith.constant 0 : index
    %c0_10 = arith.constant 0 : index
    %11 = vector.load %arg4[%c0_8, %c0_9, %c0_10] : memref<1x1x128xf32, #tpu.memory_space<vmem>>, vector<1x1x128xf32>
    %12 = vector.shape_cast %11 : vector<1x1x128xf32> to vector<1x128xf32>
    %13 = vector.shape_cast %10 : vector<1x128xf32> to vector<1x1x128xf32>
    tpu.vector_store %arg4[%c0_8, %c0_9, %c0_10], %13 {strides = array<i32>} : memref<1x1x128xf32, #tpu.memory_space<vmem>>, vector<1x1x128xf32>,
    return
  }
  func.func @transform_0(%arg0: i32) -> (i32, i32) {
    %c0_i32 = arith.constant 0 : i32
    %c0_i32_0 = arith.constant 0 : i32
    return %arg0, %c0_i32 : i32, i32
  }
  func.func @transform_1(%arg0: i32) -> (i32, i32) {
    %c0_i32 = arith.constant 0 : i32
    %c0_i32_0 = arith.constant 0 : i32
    %c0_i32_1 = arith.constant 0 : i32
    return %c0_i32, %c0_i32_0 : i32, i32
  }
  func.func @transform_2(%arg0: i32) -> (i32, i32, i32) {
    %c0_i32 = arith.constant 0 : i32
    %c0_i32_0 = arith.constant 0 : i32
    %c0_i32_1 = arith.constant 0 : i32
    return %arg0, %c0_i32, %c0_i32_0 : i32, i32, i32
  }
  func.func @transform_3(%arg0: i32) -> (i32, i32, i32) {
    %c0_i32 = arith.constant 0 : i32
    %c0_i32_0 = arith.constant 0 : i32
    %c0_i32_1 = arith.constant 0 : i32
    return %arg0, %c0_i32, %c0_i32_0 : i32, i32, i32
  }
}

</mosaic_0001>

<llo_original>
// kernel: tpu_custom_call.1
$region0: #{tpu_custom_call.1}
  #allocation0 [shape = 'u32[]', space=smem, size = 0x4, offset = 0x4, fixed_abs, tag = 'smem constant byte address 0x4 - core index']
  #allocation1 [shape = 'u32[72,128]{1,0:T(1,128)}', space=vmem, size = 0x9000, scoped, tag = 'internal scratch']
  %s0 = inlined_call_operand.hbm [shape: bf16[16,32], index: 0, kind: input, shape index: {}]
  %s1 = inlined_call_operand.hbm [shape: bf16[32,128], index: 1, kind: input, shape index: {}]
  %s2 = inlined_call_operand.hbm [shape: f32[1,1,128], index: 2, kind: output, shape index: {0}]
  %s3 = inlined_call_operand.hbm [shape: f32[1,1,128], index: 3, kind: output, shape index: {1}]
  %4 = xla_tuple %s2, %s3
  %s5 = sld [smem:[#allocation0]]
  $region34: #{tpu_custom_call.1} parent=0
    _
  %s7 = ssub.s32 1, %s5
  %s8 = scalar_select 0, %s7, %s5
  $region1: #{tpu_custom_call.1} parent=0
    #allocation2 [shape = 'u8[4096]{0}', space=vmem, size = 0x1000, scoped, tag = 'input window, operand 0, single buffered']
    #allocation3 [shape = 's32[1]{0}', space=sflag, size = 0x4, scoped, tag = 'scoped memory for tpu_custom_call.1']
    #allocation4 [shape = 's32[1]{0}', space=sflag, size = 0x4, scoped, tag = 'scoped memory for tpu_custom_call.1']
    #allocation5 [shape = 'u8[8192]{0}', space=vmem, size = 0x2000, scoped, tag = 'input window, operand 1, single buffered']
    #allocation6 [shape = 's32[1]{0}', space=sflag, size = 0x4, scoped, tag = 'scoped memory for tpu_custom_call.1']
    #allocation7 [shape = 'u8[512]{0}', space=vmem, size = 0x400, scoped, tag = 'output window, operand 0, single buffered']
    #allocation8 [shape = 'u8[512]{0}', space=vmem, size = 0x400, scoped, tag = 'output window, operand 1, single buffered']
    #allocation9 [shape = 's32[1]{0}', space=sflag, size = 0x4, scoped, tag = 'scoped memory for tpu_custom_call.1']
    %9 = vsyncpa [#allocation3], 0
    %10 = vsyncpa [#allocation6], 0
    %11 = vsyncpa [#allocation4], 0
    %12 = vsyncpa [#allocation9], 0
    // Predicated region
    $region2: #{tpu_custom_call.1} parent=1 // pred_check
      _
    $region3: #{tpu_custom_call.1} parent=1 // pred_check_branch
      %14 = sbr.rel (0) target = $region5
    $region4: #{tpu_custom_call.1} parent=1 // pred_region
      %16 = vsyncadd [#allocation3], 0
      %s17 = sshll.u32 %s0, 4
      %s18 = int_to_ptr.hbm [resolvable:$true] %s17
      %s19 = sshll.u32 [#allocation2], 4
      %s20 = int_to_ptr.vmem [resolvable:$true] %s19
      %25 = dma.hbm_to_vmem [thread:$0]  %s18, 128, %s20, [#allocation3], 64, 64, 4
    $region5: #{tpu_custom_call.1} parent=1 // pred_fallthru
      _
    // Predicated region
    $region6: #{tpu_custom_call.1} parent=1 // pred_check
      _
    $region7: #{tpu_custom_call.1} parent=1 // pred_check_branch
      %27 = sbr.rel (0) target = $region9
    $region8: #{tpu_custom_call.1} parent=1 // pred_region
      %29 = vsyncadd [#allocation6], 0
      %s30 = sshll.u32 %s1, 4
      %s31 = int_to_ptr.hbm [resolvable:$true] %s30
      %s32 = sshll.u32 [#allocation5], 4
      %s33 = int_to_ptr.vmem [resolvable:$true] %s32
      %38 = dma.hbm_to_vmem [thread:$0]  %s31, 256, %s33, [#allocation6], 64, 64, 4
    $region9: #{tpu_custom_call.1} parent=1 // pred_fallthru
      _
    // Predicated region
    $region10: #{tpu_custom_call.1} parent=1 // pred_check
      _
    $region11: #{tpu_custom_call.1} parent=1 // pred_check_branch
      %40 = sbr.rel (0) target = $region13
    $region12: #{tpu_custom_call.1} parent=1 // pred_region
      %42 = dma.done [#allocation3], 128
    $region13: #{tpu_custom_call.1} parent=1 // pred_fallthru
      _
    // Predicated region
    $region14: #{tpu_custom_call.1} parent=1 // pred_check
      _
    $region15: #{tpu_custom_call.1} parent=1 // pred_check_branch
      %44 = sbr.rel (0) target = $region17
    $region16: #{tpu_custom_call.1} parent=1 // pred_region
      %46 = dma.done [#allocation6], 256
    $region17: #{tpu_custom_call.1} parent=1 // pred_fallthru
      _
    %v48 = vld [vmem:[#allocation2] sm:$0xf]
    %v49 = vld [vmem:[#allocation2 + $0x4] sm:$0xf]
    %v50 = vld [vmem:[#allocation5] sm:$0xf]
    %v51 = vld [vmem:[#allocation5 + $0x4] sm:$0xf]
    %v52 = vld [vmem:[#allocation5 + $0x8] sm:$0xf]
    %v53 = vld [vmem:[#allocation5 + $0xc] sm:$0xf]
    %v56 = vunpack.c.l.b16 %v48
    %v57 = vunpack.c.l.b16 %v49
    %v58 = vpack.c.b16 %v57, %v56
    %v63 = vunpack.c.l.b16 %v50
    %v64 = vunpack.c.l.b16 %v51
    %v65 = vunpack.c.l.b16 %v52
    %v66 = vunpack.c.l.b16 %v53
    %v67 = vpack.c.b16 %v64, %v63
    %v68 = vpack.c.b16 %v66, %v65
    %vm71 = vcmask 261120
    %v73 = vsel %vm71, %v58, 0
    %75 = vmatpush.bf16.msra.mxu0 0
    %76 = vmatpush.bf16.msra.mxu0 0
    %77 = vmatpush.bf16.msra.mxu0 0
    %78 = vmatpush.bf16.msra.mxu0 0
    %79 = vmatpush.bf16.msra.mxu0 0
    %80 = vmatpush.bf16.msra.mxu0 0
    %81 = vmatpush.bf16.msra.mxu0 %v68
    %82 = vmatpush.bf16.msra.mxu0 %v67
    %83 = vmatmul.bf16.gmra.mxu0 %v73
    %v84 = vpop.f32.mrf.mxu0
    %v85 = vadd.f32 0.0, %v84
    %v86 = vpop.f32.mrf.mxu0
    %v87 = vadd.f32 0.0, %v86
    %88 = vdwg.mxu0
    %v89 = vadd.f32 %v85, %v87
    %v90 = vrot.slane %v89, 4
    %v91 = vadd.f32 %v89, %v90
    %v92 = vrot.slane %v91, 2
    %v93 = vadd.f32 %v91, %v92
    %v94 = vrot.slane %v93, 1
    %v95 = vadd.f32 %v93, %v94
    %96 = vst [vmem:[#allocation7] sm:$0x1] %v95
    %v97 = vmul.f32 %v85, %v85
    %v98 = vmul.f32 %v87, %v87
    %v99 = vadd.f32 %v97, %v98
    %v100 = vrot.slane %v99, 4
    %v101 = vadd.f32 %v99, %v100
    %v102 = vrot.slane %v101, 2
    %v103 = vadd.f32 %v101, %v102
    %v104 = vrot.slane %v103, 1
    %v105 = vadd.f32 %v103, %v104
    %106 = vst [vmem:[#allocation8] sm:$0x1] %v105
    // Predicated region
    $region18: #{tpu_custom_call.1} parent=1 // pred_check
      _
    $region19: #{tpu_custom_call.1} parent=1 // pred_check_branch
      %108 = sbr.rel (0) target = $region21
    $region20: #{tpu_custom_call.1} parent=1 // pred_region
      %110 = vsyncadd [#allocation4], 0
      %s112 = sshll.u32 [#allocation7], 4
      %s113 = int_to_ptr.vmem [resolvable:$true] %s112
      %s114 = sshll.u32 %s2, 4
      %s115 = int_to_ptr.hbm [resolvable:$true] %s114
      %117 = dma.vmem_to_hbm [thread:$0]  %s113, 16, %s115, [#allocation4]
    $region21: #{tpu_custom_call.1} parent=1 // pred_fallthru
      _
    // Predicated region
    $region22: #{tpu_custom_call.1} parent=1 // pred_check
      _
    $region23: #{tpu_custom_call.1} parent=1 // pred_check_branch
      %119 = sbr.rel (0) target = $region25
    $region24: #{tpu_custom_call.1} parent=1 // pred_region
      %121 = vsyncadd [#allocation9], 0
      %s123 = sshll.u32 [#allocation8], 4
      %s124 = int_to_ptr.vmem [resolvable:$true] %s123
      %s125 = sshll.u32 %s3, 4
      %s126 = int_to_ptr.hbm [resolvable:$true] %s125
      %128 = dma.vmem_to_hbm [thread:$0]  %s124, 16, %s126, [#allocation9]
    $region25: #{tpu_custom_call.1} parent=1 // pred_fallthru
      _
    // Predicated region
    $region26: #{tpu_custom_call.1} parent=1 // pred_check
      _
    $region27: #{tpu_custom_call.1} parent=1 // pred_check_branch
      %130 = sbr.rel (0) target = $region29
    $region28: #{tpu_custom_call.1} parent=1 // pred_region
      %132 = dma.done [#allocation4], 16
    $region29: #{tpu_custom_call.1} parent=1 // pred_fallthru
      _
    // Predicated region
    $region30: #{tpu_custom_call.1} parent=1 // pred_check
      _
    $region31: #{tpu_custom_call.1} parent=1 // pred_check_branch
      %134 = sbr.rel (0) target = $region33
    $region32: #{tpu_custom_call.1} parent=1 // pred_region
      %136 = dma.done [#allocation9], 16
    $region33: #{tpu_custom_call.1} parent=1 // pred_fallthru
      _
    %137 = vsyncpa [#allocation3], 1
    %138 = vsyncpa [#allocation6], 1
    %139 = vsyncpa [#allocation4], 1
    %140 = vsyncpa [#allocation9], 1

</llo_original>
